<compile_context>
chip_gen: v5e
topology: v5e:2x2
jax: 0.10.0
libtpu: 0.0.40
codegen_flags: <defaults>
</compile_context>

<pallas_src>
import jax
import jax.numpy as jnp
from jax import lax
from jax.experimental import pallas as pl
from jax.experimental.pallas import tpu as pltpu

tree_map = jax.tree_util.tree_map

# CAEModel hyper-parameters from Learner.__init__
HIDDEN = 7
L1_PEN = 0.05
ALPHA = 10.0
RHO = 0.0002

# Inner/outer optimizer hyper-parameters from Learner / MetaLearner.__init__
INNER_LRS = (0.002, 0.02, 0.001)    # optim_1 (model_2), optim_2, optim_3 (SGD)
META_STEP = 1                       # fused kernel relies on this being 1

SCAL_W = 128                        # lane-dense scalar slab: [0]=loss, [1]=h

_NT = (((1,), (1,)), ((), ()))      # a @ b.T   (contract last dims)
_T0 = (((0,), (0,)), ((), ()))      # a.T @ b   (contract first dims)

_VMEM = pl.BlockSpec(memory_space=pltpu.MemorySpace.VMEM)


# ---------------------------------------------------------------------------
# Packed decoder-MLP slab (hidden=7 padded to d so every block is full width;
# zero padding is gradient-invariant):
#   rows [0, d) = W1, rows [d, 2d) = W2, row 2d = b1, row 2d+1 = b2.
# ---------------------------------------------------------------------------
def _slab_rows(d):
    return 2 * d + 2


def pack_mlp(W1, b1, W2, b2, d):
    hidden = W1.shape[1]
    assert hidden <= d, "slab packing assumes hidden_size <= d"
    W1p = jnp.zeros((d, d), jnp.float32).at[:, :hidden].set(W1)
    W2p = jnp.zeros((d, d), jnp.float32).at[:hidden, :].set(W2)
    b1p = jnp.zeros((1, d), jnp.float32).at[:, :hidden].set(b1)
    b2p = jnp.asarray(b2, jnp.float32).reshape(1, d)
    return jnp.concatenate([W1p, W2p, b1p, b2p], axis=0)        # (2d+2, d)


def _unpack_slab(slab, d):
    """Static sub-views; works on a VMEM Ref (loads) and on a jnp array."""
    W1 = slab[0:d, :]
    W2 = slab[d:2 * d, :]
    b1 = slab[2 * d:2 * d + 1, :]
    b2 = slab[2 * d + 1:2 * d + 2, :]
    return W1, b1, W2, b2


# ---------------------------------------------------------------------------
# Shared math (used inside the Pallas kernels and as the pure-JAX reference
# for the spot checks, so forward and backward cannot drift).
# ---------------------------------------------------------------------------
def _eye(d):
    row = lax.broadcasted_iota(jnp.int32, (d, d), 0)
    col = lax.broadcasted_iota(jnp.int32, (d, d), 1)
    return (row == col).astype(jnp.float32)


def _mat_power(A, k):
    """A^k for static k >= 1 via binary exponentiation, unrolled at trace time."""
    assert k >= 1
    result = None
    base = A
    while True:
        if k & 1:
            result = base if result is None else jnp.dot(
                result, base, preferred_element_type=jnp.float32)
        k >>= 1
        if k == 0:
            return result
        base = jnp.dot(base, base, preferred_element_type=jnp.float32)


def _dot_nt(a, b):
    """a @ b.T (contract last dims of both) on the MXU."""
    return lax.dot_general(a, b, _NT, preferred_element_type=jnp.float32)


def _dot_t0(a, b):
    """a.T @ b (contract first dims of both) on the MXU -- no materialized
    transpose (perf feedback: replaces the identity-matmul transposes)."""
    return lax.dot_general(a, b, _T0, preferred_element_type=jnp.float32)


def _sign(x):
    return jnp.where(x > 0.0, 1.0, jnp.where(x < 0.0, -1.0, 0.0))


def _mlp_forward(X, W, W1, b1, W2, b2):
    M = jnp.dot(X, W, preferred_element_type=jnp.float32)            # (n, d)
    Z = jnp.dot(M, W1, preferred_element_type=jnp.float32) + b1      # (n, d)
    Hd = jnp.maximum(Z, 0.0)
    Xhat = jnp.dot(Hd, W2, preferred_element_type=jnp.float32) + b2  # (n, d)
    return M, Z, Hd, Xhat


def _loss_terms(X, W, W1, b1, W2, b2, eye, d):
    """Full CAE loss: MSE + L1(W) + alpha*h + 0.5*rho*h^2."""
    n = X.shape[0]
    _, _, _, Xhat = _mlp_forward(X, W, W1, b1, W2, b2)
    R = Xhat - X
    mse = (0.5 / float(n)) * jnp.sum(R * R)
    l1 = L1_PEN * jnp.sum(jnp.abs(W))
    A = eye + (W * W) * (1.0 / float(d))
    P = _mat_power(A, d)
    h = jnp.sum(P * eye) - float(d)
    loss = mse + l1 + ALPHA * h + 0.5 * RHO * h * h
    return loss, Xhat, h


# ---------------------------------------------------------------------------
# Pallas kernels
# ---------------------------------------------------------------------------
def _write_scalars(scal_ref, loss, h):
    # Both scalars packed into one lane-dense (1, 128) slab.
    lane = lax.broadcasted_iota(jnp.int32, (1, SCAL_W), 1)
    scal_ref[...] = jnp.where(lane == 0, loss, jnp.where(lane == 1, h, 0.0))


def cae_fwd_pred_kernel(x_ref, w_ref, mlp_ref, scal_ref, pred_ref):
    """model_1_forward: loss, reconstruction and h."""
    d = w_ref.shape[0]
    W1, b1, W2, b2 = _unpack_slab(mlp_ref, d)
    loss, Xhat, h = _loss_terms(x_ref[...], w_ref[...], W1, b1, W2, b2,
                                _eye(d), d)
    pred_ref[...] = Xhat
    _write_scalars(scal_ref, loss, h)


def learner_fused_kernel(xs_ref, w_ref, wt_ref, mlp_ref,
                         scal_ref, dw_ref, dmlp_ref):
    """Fused Learner.forward (META_STEP == 1):

    For each inner model m (all start from model_1's params) compute the
    analytic gradient of its CAE loss on data_m, accumulate
        sum_grads = mean_m(theta_after - theta_before) = -(1/3) sum_m lr_m*g_m,
    and for m == 2 (model_4) evaluate the loss of the post-SGD parameters on
    data3 -- the only trailing evaluation that survives in the reference code.
    """
    d = w_ref.shape[0]
    n = xs_ref.shape[1]
    inv_n = 1.0 / float(n)
    eye = _eye(d)

    W = w_ref[...]
    WT = wt_ref[...]                              # W^T, pre-transposed by the wrapper
    W1, b1, W2, b2 = _unpack_slab(mlp_ref, d)     # static ref sub-views

    # --- regularizer forward + gradient, shared by all three inner models ---
    # (A^(d-1))^T = (A^T)^(d-1) with A^T built from W^T -> no in-kernel
    # transpose; h = trace(A^d) = sum((A^(d-1))^T * A) -> no extra matmul.
    A = eye + (W * W) * (1.0 / float(d))
    AT = eye + (WT * WT) * (1.0 / float(d))
    Adm1T = _mat_power(AT, d - 1)
    h = jnp.sum(Adm1T * A) - float(d)
    G_reg = L1_PEN * _sign(W) + (ALPHA + RHO * h) * 2.0 * Adm1T * W

    acc_dW = jnp.zeros((d, d), jnp.float32)
    acc_dW1 = jnp.zeros((d, d), jnp.float32)
    acc_dW2 = jnp.zeros((d, d), jnp.float32)
    acc_db1 = jnp.zeros((1, d), jnp.float32)
    acc_db2 = jnp.zeros((1, d), jnp.float32)
    test_loss = jnp.float32(0.0)
    h_last = jnp.float32(0.0)

    for m in range(3):                            # static loop, one kernel call
        X = xs_ref[m]                             # (n, d)
        lr = INNER_LRS[m]

        # forward
        M, Z, Hd, Xhat = _mlp_forward(X, W, W1, b1, W2, b2)
        R = Xhat - X

        # analytic backward of the reconstruction term (reg grad added once)
        dXhat = R * inv_n
        db2 = jnp.sum(dXhat, axis=0, keepdims=True)
        dW2 = _dot_t0(Hd, dXhat)                  # Hd^T @ dXhat
        dHd = _dot_nt(dXhat, W2)                  # dXhat @ W2^T
        dZ = jnp.where(Z > 0.0, dHd, 0.0)         # relu backward
        db1 = jnp.sum(dZ, axis=0, keepdims=True)
        dW1 = _dot_t0(M, dZ)                      # M^T @ dZ
        dM = _dot_nt(dZ, W1)                      # dZ @ W1^T
        dW = _dot_t0(X, dM) + G_reg               # X^T @ dM + reg grad

        c = -lr / 3.0                             # mean of (after - before)
        acc_dW = acc_dW + c * dW
        acc_dW1 = acc_dW1 + c * dW1
        acc_dW2 = acc_dW2 + c * dW2
        acc_db1 = acc_db1 + c * db1
        acc_db2 = acc_db2 + c * db2

        if m == 2:
            # Only live trailing eval: model_4 after its SGD step, on data3.
            test_loss, _, h_last = _loss_terms(
                X, W - lr * dW, W1 - lr * dW1, b1 - lr * db1,
                W2 - lr * dW2, b2 - lr * db2, eye, d)

    dw_ref[...] = acc_dW
    # gradient slab written back once, in the pack_mlp layout
    dmlp_ref[0:d, :] = acc_dW1
    dmlp_ref[d:2 * d, :] = acc_dW2
    dmlp_ref[2 * d:2 * d + 1, :] = acc_db1
    dmlp_ref[2 * d + 1:2 * d + 2, :] = acc_db2
    _write_scalars(scal_ref, test_loss, h_last)


# ---------------------------------------------------------------------------
# pallas_call wrappers
# ---------------------------------------------------------------------------
def cae_forward_pred(params, X):
    n, d = X.shape
    sr = _slab_rows(d)
    mm_nd = 2 * n * d * d
    mm_dd = 2 * d * d * d
    cost = pl.CostEstimate(
        flops=3 * mm_nd + 3 * mm_dd, transcendentals=0,
        bytes_accessed=4 * (2 * n * d + d * d + sr * d + SCAL_W))
    scal, pred = pl.pallas_call(
        cae_fwd_pred_kernel,
        out_shape=(jax.ShapeDtypeStruct((1, SCAL_W), jnp.float32),
                   jax.ShapeDtypeStruct((n, d), jnp.float32)),
        in_specs=[_VMEM, _VMEM, _VMEM],
        out_specs=(_VMEM, _VMEM),
        cost_estimate=cost,
    )(X, params["W"], params["mlp"])
    return scal[0, 0], pred, scal[0, 1]


def learner_forward(params1, Xs):
    """Learner.forward: one fused pallas_call returning (test_loss, sum_grads)."""
    assert META_STEP == 1
    _, n, d = Xs.shape
    sr = _slab_rows(d)
    W = params1["W"]
    mm_nd = 2 * n * d * d
    mm_dd = 2 * d * d * d
    cost = pl.CostEstimate(
        flops=3 * 8 * mm_nd + 3 * mm_nd + 7 * mm_dd, transcendentals=0,
        bytes_accessed=4 * (3 * n * d + 3 * d * d + 2 * sr * d + SCAL_W))
    scal, dW, dmlp = pl.pallas_call(
        learner_fused_kernel,
        out_shape=(jax.ShapeDtypeStruct((1, SCAL_W), jnp.float32),
                   jax.ShapeDtypeStruct((d, d), jnp.float32),
                   jax.ShapeDtypeStruct((sr, d), jnp.float32)),
        in_specs=[_VMEM, _VMEM, _VMEM, _VMEM],
        out_specs=(_VMEM, _VMEM, _VMEM),
        cost_estimate=cost,
    )(Xs, W, W.T, params1["mlp"])
    return scal[0, 0], {"W": dW, "mlp": dmlp}


# ---------------------------------------------------------------------------
# Optimizers (functional torch.optim.Adam equivalent for the outer step).
# ---------------------------------------------------------------------------
def adam_init(params):
    return {"m": tree_map(jnp.zeros_like, params),
            "v": tree_map(jnp.zeros_like, params),
            "t": jnp.zeros((), jnp.int32)}


def adam_step(params, grads, state, lr, b1=0.9, b2=0.999, eps=1e-8):
    t = state["t"] + 1
    tf = t.astype(jnp.float32)
    m = tree_map(lambda m_, g: b1 * m_ + (1 - b1) * g, state["m"], grads)
    v = tree_map(lambda v_, g: b2 * v_ + (1 - b2) * g * g, state["v"], grads)
    c1 = 1.0 - b1 ** tf
    c2 = 1.0 - b2 ** tf
    new_params = tree_map(
        lambda p, m_, v_: p - lr * (m_ / c1) / (jnp.sqrt(v_ / c2) + eps),
        params, m, v)
    return new_params, {"m": m, "v": v, "t": t}


# ---------------------------------------------------------------------------
# MetaLearner.forward: each epoch model_1's grads are replaced by sum_grads
# (the register_hook trick) and Adam(lr=beta) steps.  model_1_forward is
# hoisted out of the loop (its per-epoch values are dead for the trajectory).
# ---------------------------------------------------------------------------
def metalearner_forward(params1, adam_state, data, M1, M2, M3, epoch, beta):
    Xs = jnp.stack([M1, M2, M3])                  # stacked once, reused
    for _ in range(epoch):
        _test_loss, sum_grads = learner_forward(params1, Xs)
        params1, adam_state = adam_step(params1, sum_grads, adam_state, beta)
    dummy_loss, pred, h = cae_forward_pred(params1, data)   # model_1_forward
    return params1, adam_state, (dummy_loss, pred, h)


metalearner_forward_jit = jax.jit(metalearner_forward, static_argnums=(6,))


# ---------------------------------------------------------------------------
# Deterministic parameter init (CAEModel: adjacency W + hidden_size=7 MLP).
# ---------------------------------------------------------------------------
def init_cae_params(key, d, hidden=HIDDEN):
    k1, k2, k3 = jax.random.split(key, 3)
    W = 0.1 * jax.random.uniform(k1, (d, d), dtype=jnp.float32)
    W1 = 0.1 * jax.random.normal(k2, (d, hidden), dtype=jnp.float32)
    b1 = jnp.zeros((1, hidden), jnp.float32)
    W2 = 0.1 * jax.random.normal(k3, (hidden, d), dtype=jnp.float32)
    b2 = jnp.zeros((1, d), jnp.float32)
    return {"W": W, "mlp": pack_mlp(W1, b1, W2, b2, d)}


def _loss_ref(params, X):
    """Pure-JAX reference loss (same math as the kernels)."""
    d = params["W"].shape[0]
    W1, b1, W2, b2 = _unpack_slab(params["mlp"], d)
    loss, _, _ = _loss_terms(X, params["W"], W1, b1, W2, b2, _eye(d), d)
    return loss


if __name__ == "__main__":
    n, d = 32, 8          # n samples, d variables
    beta = 1e-3           # MetaLearner outer Adam lr
    epoch = 2

    key = jax.random.PRNGKey(0)
    kp, kd, k1, k2, k3 = jax.random.split(key, 5)

    params1 = init_cae_params(kp, d)              # learner.model_1 parameters
    adam_state = adam_init(params1)               # MetaLearner Adam state

    data = jax.random.normal(kd, (n, d), dtype=jnp.float32)
    Mdate1 = jax.random.normal(k1, (n, d), dtype=jnp.float32)
    Mdate2 = jax.random.normal(k2, (n, d), dtype=jnp.float32)
    Mdate3 = jax.random.normal(k3, (n, d), dtype=jnp.float32)

    # --- spot check 1: forward/pred kernel vs. shared pure-JAX math
    # (loose tolerances: in-kernel MXU f32 path vs. XLA reference precision).
    loss_k, pred_k, h_k = cae_forward_pred(params1, data)
    W1r, b1r, W2r, b2r = _unpack_slab(params1["mlp"], d)
    loss_r, pred_r, h_r = _loss_terms(data, params1["W"], W1r, b1r, W2r, b2r,
                                      _eye(d), d)
    assert jnp.allclose(pred_k, pred_r, rtol=5e-2, atol=1e-2)
    assert jnp.allclose(loss_k, loss_r, rtol=5e-2, atol=5e-1)
    assert jnp.allclose(h_k, h_r, rtol=5e-2, atol=5e-2)

    # --- spot check 2: fused learner kernel vs. jax.grad of the reference.
    Xs = jnp.stack([Mdate1, Mdate2, Mdate3])
    tl_k, sg_k = learner_forward(params1, Xs)
    g1 = jax.grad(_loss_ref)(params1, Mdate1)
    g2 = jax.grad(_loss_ref)(params1, Mdate2)
    g3 = jax.grad(_loss_ref)(params1, Mdate3)
    lr1, lr2, lr3 = INNER_LRS
    sg_r = tree_map(lambda a, b, c: -(lr1 * a + lr2 * b + lr3 * c) / 3.0,
                    g1, g2, g3)
    p4_r = tree_map(lambda p, g: p - lr3 * g, params1, g3)
    tl_r = _loss_ref(p4_r, Mdate3)
    assert jnp.allclose(sg_k["W"], sg_r["W"], rtol=5e-2, atol=2e-3)
    assert jnp.allclose(sg_k["mlp"], sg_r["mlp"], rtol=5e-2, atol=2e-3)
    assert jnp.allclose(tl_k, tl_r, rtol=5e-2, atol=5e-1)

    # --- the full MetaLearner.forward ---
    params1, adam_state, (dummy_loss, pred, h) = metalearner_forward_jit(
        params1, adam_state, data, Mdate1, Mdate2, Mdate3, epoch, beta)

    jax.block_until_ready((params1, adam_state, dummy_loss, pred, h))
    assert pred.shape == (n, d)
    assert bool(jnp.isfinite(dummy_loss)) and bool(jnp.isfinite(h))
    print("KERNEL_OK")
</pallas_src>

<mosaic_0001>
module attributes {stable_mosaic.version = 11 : i64} {
  func.func @cae_fwd_pred_kernel(%arg0: memref<32x8xf32, #tpu.memory_space<vmem>>, %arg1: memref<8x8xf32, #tpu.memory_space<vmem>>, %arg2: memref<18x8xf32, #tpu.memory_space<vmem>>, %arg3: memref<1x128xf32, #tpu.memory_space<vmem>>, %arg4: memref<32x8xf32, #tpu.memory_space<vmem>>) attributes {dimension_semantics = [], scalar_prefetch = 0 : i64, scratch_operands = 0 : i64, tpu.core_type = #tpu.core_type<tc>} {
    %c0 = arith.constant 0 : index
    %c0_0 = arith.constant 0 : index
    %0 = vector.load %arg2[%c0, %c0_0] : memref<18x8xf32, #tpu.memory_space<vmem>>, vector<8x8xf32>
    %c8 = arith.constant 8 : index
    %c0_1 = arith.constant 0 : index
    %1 = vector.load %arg2[%c8, %c0_1] : memref<18x8xf32, #tpu.memory_space<vmem>>, vector<8x8xf32>
    %c16 = arith.constant 16 : index
    %c0_2 = arith.constant 0 : index
    %2 = vector.load %arg2[%c16, %c0_2] : memref<18x8xf32, #tpu.memory_space<vmem>>, vector<1x8xf32>
    %c17 = arith.constant 17 : index
    %c0_3 = arith.constant 0 : index
    %3 = vector.load %arg2[%c17, %c0_3] : memref<18x8xf32, #tpu.memory_space<vmem>>, vector<1x8xf32>
    %c0_4 = arith.constant 0 : index
    %c0_5 = arith.constant 0 : index
    %4 = vector.load %arg0[%c0_4, %c0_5] : memref<32x8xf32, #tpu.memory_space<vmem>>, vector<32x8xf32>
    %c0_6 = arith.constant 0 : index
    %c0_7 = arith.constant 0 : index
    %5 = vector.load %arg1[%c0_6, %c0_7] : memref<8x8xf32, #tpu.memory_space<vmem>>, vector<8x8xf32>
    %6 = tpu.iota {dimensions = array<i32: 0>} : vector<8x8xi32>
    %7 = tpu.iota {dimensions = array<i32: 1>} : vector<8x8xi32>
    %8 = arith.cmpi eq, %6, %7 : vector<8x8xi32>
    %9 = arith.extui %8 : vector<8x8xi1> to vector<8x8xi32>
    %10 = arith.sitofp %9 : vector<8x8xi32> to vector<8x8xf32>
    %cst = arith.constant dense<0.000000e+00> : vector<32x8xf32>
    %11 = tpu.matmul %4, %5, %cst {dimension_numbers = #tpu.dot_dimension_numbers<[1], [0], [0], [1], [0, 0, 1, 1], [], []>} : vector<32x8xf32>, vector<8x8xf32>, vector<32x8xf32> -> vector<32x8xf32>
    %cst_8 = arith.constant dense<0.000000e+00> : vector<32x8xf32>
    %12 = tpu.matmul %11, %0, %cst_8 {dimension_numbers = #tpu.dot_dimension_numbers<[1], [0], [0], [1], [0, 0, 1, 1], [], []>} : vector<32x8xf32>, vector<8x8xf32>, vector<32x8xf32> -> vector<32x8xf32>
    %13 = vector.broadcast %2 : vector<1x8xf32> to vector<32x8xf32>
    %14 = arith.addf %12, %13 : vector<32x8xf32>
    %cst_9 = arith.constant 0.000000e+00 : f32
    %15 = vector.broadcast %cst_9 : f32 to vector<32x8xf32>
    %16 = arith.maximumf %14, %15 : vector<32x8xf32>
    %cst_10 = arith.constant dense<0.000000e+00> : vector<32x8xf32>
    %17 = tpu.matmul %16, %1, %cst_10 {dimension_numbers = #tpu.dot_dimension_numbers<[1], [0], [0], [1], [0, 0, 1, 1], [], []>} : vector<32x8xf32>, vector<8x8xf32>, vector<32x8xf32> -> vector<32x8xf32>
    %18 = vector.broadcast %3 : vector<1x8xf32> to vector<32x8xf32>
    %19 = arith.addf %17, %18 : vector<32x8xf32>
    %20 = arith.subf %19, %4 : vector<32x8xf32>
    %21 = arith.mulf %20, %20 : vector<32x8xf32>
    %22 = vector.shape_cast %21 : vector<32x8xf32> to vector<1x32x8xf32>
    %cst_11 = arith.constant dense<0.000000e+00> : vector<1xf32>
    %23 = vector.multi_reduction <add>, %22, %cst_11 [1, 2] : vector<1x32x8xf32> to vector<1xf32>
    %24 = vector.shape_cast %23 : vector<1xf32> to vector<1x1x1xf32>
    %25 = vector.extract %24[0, 0, 0] : f32 from vector<1x1x1xf32>
    %cst_12 = arith.constant 1.562500e-02 : f32
    %26 = arith.mulf %cst_12, %25 : f32
    %27 = math.absf %5 : vector<8x8xf32>
    %28 = vector.shape_cast %27 : vector<8x8xf32> to vector<1x8x8xf32>
    %cst_13 = arith.constant dense<0.000000e+00> : vector<1xf32>
    %29 = vector.multi_reduction <add>, %28, %cst_13 [1, 2] : vector<1x8x8xf32> to vector<1xf32>
    %30 = vector.shape_cast %29 : vector<1xf32> to vector<1x1x1xf32>
    %31 = vector.extract %30[0, 0, 0] : f32 from vector<1x1x1xf32>
    %cst_14 = arith.constant 5.000000e-02 : f32
    %32 = arith.mulf %cst_14, %31 : f32
    %33 = arith.mulf %5, %5 : vector<8x8xf32>
    %cst_15 = arith.constant 1.250000e-01 : f32
    %34 = vector.broadcast %cst_15 : f32 to vector<8x8xf32>
    %35 = arith.mulf %33, %34 : vector<8x8xf32>
    %36 = arith.addf %10, %35 : vector<8x8xf32>
    %cst_16 = arith.constant dense<0.000000e+00> : vector<8x8xf32>
    %37 = tpu.matmul %36, %36, %cst_16 {dimension_numbers = #tpu.dot_dimension_numbers<[1], [0], [0], [1], [0, 0, 1, 1], [], []>} : vector<8x8xf32>, vector<8x8xf32>, vector<8x8xf32> -> vector<8x8xf32>
    %cst_17 = arith.constant dense<0.000000e+00> : vector<8x8xf32>
    %38 = tpu.matmul %37, %37, %cst_17 {dimension_numbers = #tpu.dot_dimension_numbers<[1], [0], [0], [1], [0, 0, 1, 1], [], []>} : vector<8x8xf32>, vector<8x8xf32>, vector<8x8xf32> -> vector<8x8xf32>
    %cst_18 = arith.constant dense<0.000000e+00> : vector<8x8xf32>
    %39 = tpu.matmul %38, %38, %cst_18 {dimension_numbers = #tpu.dot_dimension_numbers<[1], [0], [0], [1], [0, 0, 1, 1], [], []>} : vector<8x8xf32>, vector<8x8xf32>, vector<8x8xf32> -> vector<8x8xf32>
    %40 = arith.mulf %39, %10 : vector<8x8xf32>
    %41 = vector.shape_cast %40 : vector<8x8xf32> to vector<1x8x8xf32>
    %cst_19 = arith.constant dense<0.000000e+00> : vector<1xf32>
    %42 = vector.multi_reduction <add>, %41, %cst_19 [1, 2] : vector<1x8x8xf32> to vector<1xf32>
    %43 = vector.shape_cast %42 : vector<1xf32> to vector<1x1x1xf32>
    %44 = vector.extract %43[0, 0, 0] : f32 from vector<1x1x1xf32>
    %cst_20 = arith.constant 8.000000e+00 : f32
    %45 = arith.subf %44, %cst_20 : f32
    %46 = arith.addf %26, %32 : f32
    %cst_21 = arith.constant 1.000000e+01 : f32
    %47 = arith.mulf %cst_21, %45 : f32
    %48 = arith.addf %46, %47 : f32
    %cst_22 = arith.constant 9.99999974E-5 : f32
    %49 = arith.mulf %cst_22, %45 : f32
    %50 = arith.mulf %49, %45 : f32
    %51 = arith.addf %48, %50 : f32
    %c0_23 = arith.constant 0 : index
    %c0_24 = arith.constant 0 : index
    %52 = vector.load %arg4[%c0_23, %c0_24] : memref<32x8xf32, #tpu.memory_space<vmem>>, vector<32x8xf32>
    tpu.vector_store %arg4[%c0_23, %c0_24], %19 {strides = array<i32>} : memref<32x8xf32, #tpu.memory_space<vmem>>, vector<32x8xf32>,
    %53 = tpu.iota {dimensions = array<i32: 1>} : vector<1x128xi32>
    %c0_i32 = arith.constant 0 : i32
    %54 = vector.broadcast %c0_i32 : i32 to vector<1x128xi32>
    %55 = arith.cmpi eq, %53, %54 : vector<1x128xi32>
    %c1_i32 = arith.constant 1 : i32
    %56 = vector.broadcast %c1_i32 : i32 to vector<1x128xi32>
    %57 = arith.cmpi eq, %53, %56 : vector<1x128xi32>
    %cst_25 = arith.constant 0.000000e+00 : f32
    %58 = vector.broadcast %45 : f32 to vector<1x128xf32>
    %59 = vector.broadcast %cst_25 : f32 to vector<1x128xf32>
    %60 = arith.select %57, %58, %59 : vector<1x128xi1>, vector<1x128xf32>
    %61 = vector.broadcast %51 : f32 to vector<1x128xf32>
    %62 = arith.select %55, %61, %60 : vector<1x128xi1>, vector<1x128xf32>
    %c0_26 = arith.constant 0 : index
    %c0_27 = arith.constant 0 : index
    %63 = vector.load %arg3[%c0_26, %c0_27] : memref<1x128xf32, #tpu.memory_space<vmem>>, vector<1x128xf32>
    tpu.vector_store %arg3[%c0_26, %c0_27], %62 {strides = array<i32>} : memref<1x128xf32, #tpu.memory_space<vmem>>, vector<1x128xf32>,
    return
  }
}

</mosaic_0001>

<llo_original>
// kernel: tpu_custom_call.1
$region0: #{tpu_custom_call.1}
  #allocation0 [shape = 'u32[]', space=smem, size = 0x4, offset = 0x4, fixed_abs, tag = 'smem constant byte address 0x4 - core index']
  #allocation1 [shape = 'u32[72,128]{1,0:T(1,128)}', space=vmem, size = 0x9000, scoped, tag = 'internal scratch']
  %s0 = inlined_call_operand.vmem [shape: f32[32,8], index: 0, kind: input, shape index: {}]
  %s1 = inlined_call_operand.vmem [shape: f32[8,8], index: 1, kind: input, shape index: {}]
  %s2 = inlined_call_operand.vmem [shape: f32[18,8], index: 2, kind: input, shape index: {}]
  %s3 = inlined_call_operand.hbm [shape: f32[1,128], index: 3, kind: output, shape index: {0}]
  %s4 = inlined_call_operand.vmem [shape: f32[32,8], index: 4, kind: output, shape index: {1}]
  %5 = xla_tuple %s3, %s4
  %s6 = sld [smem:[#allocation0]]
  $region30: #{tpu_custom_call.1} parent=0
    _
  %s8 = ssub.s32 1, %s6
  %s9 = scalar_select 0, %s8, %s6
  $region1: #{tpu_custom_call.1} parent=0
    #allocation2 [shape = 'u8[512]{0}', space=vmem, size = 0x400, scoped, tag = 'output window, operand 0, single buffered']
    #allocation3 [shape = 's32[1]{0}', space=sflag, size = 0x4, scoped, tag = 'scoped memory for tpu_custom_call.1']
    %10 = vsyncpa [#allocation3], 0
    // Predicated region
    $region2: #{tpu_custom_call.1} parent=1 // pred_check
      _
    $region3: #{tpu_custom_call.1} parent=1 // pred_check_branch
      %12 = sbr.rel (0) target = $region5
    $region4: #{tpu_custom_call.1} parent=1 // pred_region
      _
    $region5: #{tpu_custom_call.1} parent=1 // pred_fallthru
      _
    // Predicated region
    $region6: #{tpu_custom_call.1} parent=1 // pred_check
      _
    $region7: #{tpu_custom_call.1} parent=1 // pred_check_branch
      %14 = sbr.rel (0) target = $region9
    $region8: #{tpu_custom_call.1} parent=1 // pred_region
      _
    $region9: #{tpu_custom_call.1} parent=1 // pred_fallthru
      _
    // Predicated region
    $region10: #{tpu_custom_call.1} parent=1 // pred_check
      _
    $region11: #{tpu_custom_call.1} parent=1 // pred_check_branch
      %16 = sbr.rel (0) target = $region13
    $region12: #{tpu_custom_call.1} parent=1 // pred_region
      _
    $region13: #{tpu_custom_call.1} parent=1 // pred_fallthru
      _
    %v17 = vld [vmem:[%s2] sm:$0xff]
    %v18 = vld [vmem:[%s2 + $0x8] sm:$0xff]
    %v19 = vld [vmem:[%s2 + $0x10] sm:$0x1]
    %v20 = vld [vmem:[%s2 + $0x11] sm:$0x1]
    %v21 = vld [vmem:[%s0] sm:$0xff]
    %v22 = vld [vmem:[%s0 + $0x8] sm:$0xff]
    %v23 = vld [vmem:[%s0 + $0x10] sm:$0xff]
    %v24 = vld [vmem:[%s0 + $0x18] sm:$0xff]
    %v25 = vld [vmem:[%s1] sm:$0xff]
    %v26 = vlaneseq
    %v27 = vshrl.u32 %v26, 7
    %v28 = vlaneseq
    %v29 = vand.u32 %v28, 127
    %vm30 = vcmp.eq.s32.totalorder %v27, %v29
    %v31 = vsel %vm30, 1, 0
    %v32 = vcvt.s32.f32 %v31
    %vm33 = vcmask 64512
    %v35 = vsel %vm33, %v21, 0
    %v38 = vsel %vm33, %v22, 0
    %v41 = vsel %vm33, %v23, 0
    %v44 = vsel %vm33, %v24, 0
    %46 = vmatpush.msra.mxu0 0.0
    %47 = vmatpush.msra.mxu0 0.0
    %48 = vmatpush.msra.mxu0 0.0
    %49 = vmatpush.msra.mxu0 0.0
    %50 = vmatpush.msra.mxu0 0.0
    %51 = vmatpush.msra.mxu0 0.0
    %52 = vmatpush.msra.mxu0 0.0
    %53 = vmatpush.msra.mxu0 0.0
    %54 = vmatpush.msra.mxu0 0.0
    %55 = vmatpush.msra.mxu0 0.0
    %56 = vmatpush.msra.mxu0 0.0
    %57 = vmatpush.msra.mxu0 0.0
    %58 = vmatpush.msra.mxu0 0.0
    %59 = vmatpush.msra.mxu0 0.0
    %60 = vmatpush.msra.mxu0 0.0
    %61 = vmatpush.msra.mxu0 %v25
    %62 = vmatmul.f32.gmra.mxu0 %v35
    %v63 = vpop.f32.mrf.mxu0
    %v64 = vadd.f32 0.0, %v63
    %65 = vmatmul.f32.gmra.mxu0 %v38
    %v66 = vpop.f32.mrf.mxu0
    %v67 = vadd.f32 0.0, %v66
    %68 = vmatmul.f32.gmra.mxu0 %v41
    %v69 = vpop.f32.mrf.mxu0
    %v70 = vadd.f32 0.0, %v69
    %71 = vmatmul.f32.gmra.mxu0 %v44
    %v72 = vpop.f32.mrf.mxu0
    %v73 = vadd.f32 0.0, %v72
    %74 = vdwg.mxu0
    %v75 = vperm.slane %v19, 0
    %v77 = vsel %vm33, %v64, 0
    %v80 = vsel %vm33, %v67, 0
    %v83 = vsel %vm33, %v70, 0
    %v86 = vsel %vm33, %v73, 0
    %88 = vmatpush.msra.mxu0 0.0
    %89 = vmatpush.msra.mxu0 0.0
    %90 = vmatpush.msra.mxu0 0.0
    %91 = vmatpush.msra.mxu0 0.0
    %92 = vmatpush.msra.mxu0 0.0
    %93 = vmatpush.msra.mxu0 0.0
    %94 = vmatpush.msra.mxu0 0.0
    %95 = vmatpush.msra.mxu0 0.0
    %96 = vmatpush.msra.mxu0 0.0
    %97 = vmatpush.msra.mxu0 0.0
    %98 = vmatpush.msra.mxu0 0.0
    %99 = vmatpush.msra.mxu0 0.0
    %100 = vmatpush.msra.mxu0 0.0
    %101 = vmatpush.msra.mxu0 0.0
    %102 = vmatpush.msra.mxu0 0.0
    %103 = vmatpush.msra.mxu0 %v17
    %104 = vmatmul.f32.gmra.mxu0 %v77
    %v105 = vpop.f32.mrf.mxu0
    %v106 = vadd.f32 %v75, %v105
    %107 = vmatmul.f32.gmra.mxu0 %v80
    %v108 = vpop.f32.mrf.mxu0
    %v109 = vadd.f32 %v75, %v108
    %110 = vmatmul.f32.gmra.mxu0 %v83
    %v111 = vpop.f32.mrf.mxu0
    %v112 = vadd.f32 %v75, %v111
    %113 = vmatmul.f32.gmra.mxu0 %v86
    %v114 = vpop.f32.mrf.mxu0
    %v115 = vadd.f32 %v75, %v114
    %116 = vdwg.mxu0
    %v117 = vmax.f32 %v106, 0.0
    %v118 = vmax.f32 %v109, 0.0
    %v119 = vmax.f32 %v112, 0.0
    %v120 = vmax.f32 %v115, 0.0
    %v121 = vperm.slane %v20, 0
    %v123 = vsel %vm33, %v117, 0
    %v126 = vsel %vm33, %v118, 0
    %v129 = vsel %vm33, %v119, 0
    %v132 = vsel %vm33, %v120, 0
    %134 = vmatpush.msra.mxu0 0.0
    %135 = vmatpush.msra.mxu0 0.0
    %136 = vmatpush.msra.mxu0 0.0
    %137 = vmatpush.msra.mxu0 0.0
    %138 = vmatpush.msra.mxu0 0.0
    %139 = vmatpush.msra.mxu0 0.0
    %140 = vmatpush.msra.mxu0 0.0
    %141 = vmatpush.msra.mxu0 0.0
    %142 = vmatpush.msra.mxu0 0.0
    %143 = vmatpush.msra.mxu0 0.0
    %144 = vmatpush.msra.mxu0 0.0
    %145 = vmatpush.msra.mxu0 0.0
    %146 = vmatpush.msra.mxu0 0.0
    %147 = vmatpush.msra.mxu0 0.0
    %148 = vmatpush.msra.mxu0 0.0
    %149 = vmatpush.msra.mxu0 %v18
    %150 = vmatmul.f32.gmra.mxu0 %v123
    %v151 = vpop.f32.mrf.mxu0
    %v152 = vadd.f32 %v121, %v151
    %153 = vmatmul.f32.gmra.mxu0 %v126
    %v154 = vpop.f32.mrf.mxu0
    %v155 = vadd.f32 %v121, %v154
    %156 = vmatmul.f32.gmra.mxu0 %v129
    %v157 = vpop.f32.mrf.mxu0
    %v158 = vadd.f32 %v121, %v157
    %159 = vmatmul.f32.gmra.mxu0 %v132
    %v160 = vpop.f32.mrf.mxu0
    %v161 = vadd.f32 %v121, %v160
    %162 = vdwg.mxu0
    %v163 = vsub.f32 %v152, %v21
    %v164 = vsub.f32 %v155, %v22
    %v165 = vsub.f32 %v158, %v23
    %v166 = vsub.f32 %v161, %v24
    %v167 = vmul.f32 %v163, %v163
    %v168 = vmul.f32 %v164, %v164
    %v169 = vmul.f32 %v165, %v165
    %v170 = vmul.f32 %v166, %v166
    %v171 = vsel %vm33, %v167, 0.0
    %v172 = vsel %vm33, %v168, 0.0
    %v173 = vadd.f32 %v171, %v172
    %v174 = vsel %vm33, %v169, 0.0
    %v175 = vadd.f32 %v173, %v174
    %v176 = vsel %vm33, %v170, 0.0
    %v177 = vadd.f32 %v175, %v176
    %178 = vadd.xlane.f32.xlu0 %v177
    %v179 = vpop.xlane.xlu0 %178
    %v180 = vrot.slane %v179, 4
    %v181 = vadd.f32 %v179, %v180
    %v182 = vrot.slane %v181, 2
    %v183 = vadd.f32 %v181, %v182
    %v184 = vrot.slane %v183, 1
    %v185 = vadd.f32 %v183, %v184
    %s186 = vtos %v185
    %s187 = smul.f32 %s186, 0.015625
    %v188 = vand.u32 2147483647, %v25
    %v189 = vsel %vm33, %v188, 0.0
    %190 = vadd.xlane.f32.xlu0 %v189
    %v191 = vpop.xlane.xlu0 %190
    %v192 = vrot.slane %v191, 4
    %v193 = vadd.f32 %v191, %v192
    %v194 = vrot.slane %v193, 2
    %v195 = vadd.f32 %v193, %v194
    %v196 = vrot.slane %v195, 1
    %v197 = vadd.f32 %v195, %v196
    %s198 = vtos %v197
    %s199 = smul.f32 %s198, 0.05
    %v200 = vmul.f32 %v25, %v25
    %v201 = vmul.f32 %v200, 0.125
    %v202 = vadd.f32 %v32, %v201
    %v204 = vsel %vm33, %v202, 0
    %206 = vmatpush.msra.mxu0 0.0
    %207 = vmatpush.msra.mxu0 0.0
    %208 = vmatpush.msra.mxu0 0.0
    %209 = vmatpush.msra.mxu0 0.0
    %210 = vmatpush.msra.mxu0 0.0
    %211 = vmatpush.msra.mxu0 0.0
    %212 = vmatpush.msra.mxu0 0.0
    %213 = vmatpush.msra.mxu0 0.0
    %214 = vmatpush.msra.mxu0 0.0
    %215 = vmatpush.msra.mxu0 0.0
    %216 = vmatpush.msra.mxu0 0.0
    %217 = vmatpush.msra.mxu0 0.0
    %218 = vmatpush.msra.mxu0 0.0
    %219 = vmatpush.msra.mxu0 0.0
    %220 = vmatpush.msra.mxu0 0.0
    %221 = vmatpush.msra.mxu0 %v202
    %222 = vmatmul.f32.gmra.mxu0 %v204
    %v223 = vpop.f32.mrf.mxu0
    %v224 = vadd.f32 0.0, %v223
    %225 = vdwg.mxu0
    %v227 = vsel %vm33, %v224, 0
    %229 = vmatpush.msra.mxu0 0.0
    %230 = vmatpush.msra.mxu0 0.0
    %231 = vmatpush.msra.mxu0 0.0
    %232 = vmatpush.msra.mxu0 0.0
    %233 = vmatpush.msra.mxu0 0.0
    %234 = vmatpush.msra.mxu0 0.0
    %235 = vmatpush.msra.mxu0 0.0
    %236 = vmatpush.msra.mxu0 0.0
    %237 = vmatpush.msra.mxu0 0.0
    %238 = vmatpush.msra.mxu0 0.0
    %239 = vmatpush.msra.mxu0 0.0
    %240 = vmatpush.msra.mxu0 0.0
    %241 = vmatpush.msra.mxu0 0.0
    %242 = vmatpush.msra.mxu0 0.0
    %243 = vmatpush.msra.mxu0 0.0
    %244 = vmatpush.msra.mxu0 %v224
    %245 = vmatmul.f32.gmra.mxu0 %v227
    %v246 = vpop.f32.mrf.mxu0
    %v247 = vadd.f32 0.0, %v246
    %248 = vdwg.mxu0
    %v250 = vsel %vm33, %v247, 0
    %252 = vmatpush.msra.mxu0 0.0
    %253 = vmatpush.msra.mxu0 0.0
    %254 = vmatpush.msra.mxu0 0.0
    %255 = vmatpush.msra.mxu0 0.0
    %256 = vmatpush.msra.mxu0 0.0
    %257 = vmatpush.msra.mxu0 0.0
    %258 = vmatpush.msra.mxu0 0.0
    %259 = vmatpush.msra.mxu0 0.0
    %260 = vmatpush.msra.mxu0 0.0
    %261 = vmatpush.msra.mxu0 0.0
    %262 = vmatpush.msra.mxu0 0.0
    %263 = vmatpush.msra.mxu0 0.0
    %264 = vmatpush.msra.mxu0 0.0
    %265 = vmatpush.msra.mxu0 0.0
    %266 = vmatpush.msra.mxu0 0.0
    %267 = vmatpush.msra.mxu0 %v247
    %268 = vmatmul.f32.gmra.mxu0 %v250
    %v269 = vpop.f32.mrf.mxu0
    %v270 = vadd.f32 0.0, %v269
    %271 = vdwg.mxu0
    %v272 = vmul.f32 %v270, %v32
    %v273 = vsel %vm33, %v272, 0.0
    %274 = vadd.xlane.f32.xlu0 %v273
    %v275 = vpop.xlane.xlu0 %274
    %v276 = vrot.slane %v275, 4
    %v277 = vadd.f32 %v275, %v276
    %v278 = vrot.slane %v277, 2
    %v279 = vadd.f32 %v277, %v278
    %v280 = vrot.slane %v279, 1
    %v281 = vadd.f32 %v279, %v280
    %s282 = vtos %v281
    %s283 = ssub.f32 %s282, 8.0
    %s284 = sadd.f32 %s187, %s199
    %s285 = smul.f32 %s283, 10.0
    %s286 = sadd.f32 %s284, %s285
    %s287 = smul.f32 %s283, 0.0001
    %s288 = smul.f32 %s287, %s283
    %s289 = sadd.f32 %s286, %s288
    %290 = vst.msk [vmem:[%s4] sm:$0xff] %vm33, %v152
    %291 = vst.msk [vmem:[%s4 + $0x8] sm:$0xff] %vm33, %v155
    %292 = vst.msk [vmem:[%s4 + $0x10] sm:$0xff] %vm33, %v158
    %293 = vst.msk [vmem:[%s4 + $0x18] sm:$0xff] %vm33, %v161
    %vm294 = vcmp.eq.s32.totalorder %v29, 0
    %vm295 = vcmp.eq.s32.totalorder %v29, 1
    %v296 = vstv %s283
    %v297 = vsel %vm295, %v296, 0.0
    %v298 = vstv %s289
    %v299 = vsel %vm294, %v298, %v297
    %300 = vst [vmem:[#allocation2] sm:$0x1] %v299
    // Predicated region
    $region14: #{tpu_custom_call.1} parent=1 // pred_check
      _
    $region15: #{tpu_custom_call.1} parent=1 // pred_check_branch
      %302 = sbr.rel (0) target = $region17
    $region16: #{tpu_custom_call.1} parent=1 // pred_region
      %304 = vsyncadd [#allocation3], 0
      %s306 = sshll.u32 [#allocation2], 4
      %s307 = int_to_ptr.vmem [resolvable:$true] %s306
      %s308 = sshll.u32 %s3, 4
      %s309 = int_to_ptr.hbm [resolvable:$true] %s308
      %311 = dma.vmem_to_hbm [thread:$0]  %s307, 16, %s309, [#allocation3]
    $region17: #{tpu_custom_call.1} parent=1 // pred_fallthru
      _
    // Predicated region
    $region18: #{tpu_custom_call.1} parent=1 // pred_check
      _
    $region19: #{tpu_custom_call.1} parent=1 // pred_check_branch
      %313 = sbr.rel (0) target = $region21
    $region20: #{tpu_custom_call.1} parent=1 // pred_region
      _
    $region21: #{tpu_custom_call.1} parent=1 // pred_fallthru
      _
    // Predicated region
    $region22: #{tpu_custom_call.1} parent=1 // pred_check
      _
    $region23: #{tpu_custom_call.1} parent=1 // pred_check_branch
      %315 = sbr.rel (0) target = $region25
    $region24: #{tpu_custom_call.1} parent=1 // pred_region
      %317 = dma.done [#allocation3], 16
    $region25: #{tpu_custom_call.1} parent=1 // pred_fallthru
      _
    // Predicated region
    $region26: #{tpu_custom_call.1} parent=1 // pred_check
      _
    $region27: #{tpu_custom_call.1} parent=1 // pred_check_branch
      %319 = sbr.rel (0) target = $region29
    $region28: #{tpu_custom_call.1} parent=1 // pred_region
      _
    $region29: #{tpu_custom_call.1} parent=1 // pred_fallthru
      _
    %320 = vsyncpa [#allocation3], 1

</llo_original>
